<compile_context>
chip_gen: v7x
topology: tpu7x:2x2x1
jax: 0.10.0
libtpu: 0.0.40
codegen_flags: <defaults>
</compile_context>

<pallas_src>
import math

import jax
import jax.numpy as jnp
import numpy as np
from jax.experimental import pallas as pl
from jax.experimental.pallas import tpu as pltpu

# ---- small synthetic hyper-parameters (constructor args of TokenLevelAlpha) --
DIM_HIDDEN = 32     # dim_hidden
DIM_LATENT = 8      # dim_latent
NUM_CLASSES = 8     # num_classes
RADIAL_LAYERS = 3   # radial_layers
BATCH = 2
SEQ_LEN = 8


def _int_pow(x, n):
    """x**n for a small static int n >= 0 via binary exponentiation (VALU muls)."""
    if n == 0:
        return jnp.ones_like(x)
    result = None
    base = x
    while n:
        if n & 1:
            result = base if result is None else result * base
        n >>= 1
        if n:
            base = base * base
    return result


def _tokenlevel_alpha_kernel(hT_ref, wT_ref, bT_ref, wrep_ref, brep_ref,
                             x0_ref, alpha_ref, fbeta_ref, logp_ref,
                             orizT_ref, betaT_ref, alphaT_ref):
    C, R = alpha_ref.shape          # num_classes, radial_layers
    L = wT_ref.shape[0]             # dim_latent
    d = L

    # --- latent_encoder on the MXU; tokens ride the lane axis ---------------
    zT = jnp.dot(wT_ref[...], hT_ref[...],
                 preferred_element_type=jnp.float32) + bT_ref[...]   # (L, T)
    orizT_ref[...] = zT                                              # dense store

    # Class-replicated latent slab straight off the (idle) MXU:
    # row dd*C + c of zc_flat == z[dd] for every class c.
    zc_flat = (jnp.dot(wrep_ref[...], hT_ref[...],
                       preferred_element_type=jnp.float32) + brep_ref[...])  # (L*C, T)
    # Latent-major "planes": plane dd is (C, T) — all slices are tile-aligned.
    zc = [zc_flat[dd * C:(dd + 1) * C, :] for dd in range(L)]

    mvn_const = -0.5 * d * math.log(2.0 * math.pi)       # N(0, I) normalizer
    evid_scale = 0.5 * d * math.log(4.0 * math.pi)       # Evidence 'latent-new'

    # --- batched radial flow: all classes computed together on (C, T) vregs --
    sum_log_det = None
    for l in range(R):
        a = alpha_ref[:, l:l + 1]                        # (C, 1) softplus(alpha') > 0
        bt = fbeta_ref[:, l:l + 1]                       # (C, 1) -alpha + softplus(beta')
        diff = [zc[dd] - x0_ref[dd * C:(dd + 1) * C, l:l + 1] for dd in range(L)]
        rsq = diff[0] * diff[0]
        for dd in range(1, L):                           # latent reduce = VALU adds
            rsq = rsq + diff[dd] * diff[dd]              # (C, T)
        r = jnp.sqrt(rsq)                                # (C, T)
        hh = pl.reciprocal(a + r, approx=True)           # EUP vrcp, no Newton step
        beta_h = bt * hh                                 # (C, T)
        zc = [zc[dd] + beta_h * diff[dd] for dd in range(L)]
        # log_det = (d-1)*log1p(beta_h) + log1p(beta_h - bt*hh*hh*r)
        #         = log((1 + beta_h)^(d-1) * (1 + beta_h*a*hh))   [a*hh == 1 - hh*r]
        log_det = jnp.log(_int_pow(1.0 + beta_h, d - 1) * (1.0 + beta_h * (a * hh)))
        sum_log_det = log_det if sum_log_det is None else sum_log_det + log_det
    if sum_log_det is None:
        sum_log_det = 0.0

    nrm = zc[0] * zc[0]
    for dd in range(1, L):
        nrm = nrm + zc[dd] * zc[dd]                      # ||z_flowed||^2, (C, T)
    log_q = (mvn_const - 0.5 * nrm) + sum_log_det + logp_ref[...]    # + log p_c
    beta_all = jnp.exp(jnp.clip(log_q + evid_scale, -30.0, 30.0))    # (C, T)
    betaT_ref[...] = beta_all                            # dense lane-major stores
    alphaT_ref[...] = 1.0 + beta_all


def token_level_alpha_forward(h, global_n_c, global_p_c,
                              w_enc, b_enc, x0, alpha_prime, beta_prime):
    """Pallas implementation of TokenLevelAlpha.forward (normalize_dis=1)."""
    del global_n_c  # only used when normalize_dis == 0 (here normalize_dis == 1)
    Bt, St, Ht = h.shape
    R, C, L = x0.shape
    N = Bt * St
    f32 = jnp.float32

    # Tile sizing: lane-dense tiles up to 2048 lanes; keep grid >= 2 when there
    # is enough work so ("parallel",) can split across v7x's two TensorCores.
    n_units = pl.cdiv(N, 128)
    tile_units = max(1, min(16, n_units // 2))
    tile_n = tile_units * 128
    n_pad = pl.cdiv(N, tile_n) * tile_n
    grid = (n_pad // tile_n,)

    # layout plumbing (plain XLA, fused under jit): token axis -> lanes
    # TODO(synk): if these pad/transposes show up at large N in xprof, feed and
    # return the (H, N)/(L, N)/(C, N) layouts directly from the caller.
    h2 = h.reshape(N, Ht).astype(f32)
    hT = jnp.pad(h2, ((0, n_pad - N), (0, 0))).T                     # (H, N_pad)

    # parameter glue (plain JAX): radial-flow invertibility reparameterization
    wT = w_enc.T.astype(f32)                                         # (L, H)
    bT = b_enc.reshape(L, 1).astype(f32)                             # (L, 1)
    wrep = jnp.repeat(wT, C, axis=0)                                 # (L*C, H) row dd*C+c = wT[dd]
    brep = jnp.repeat(bT, C, axis=0)                                 # (L*C, 1)
    x0_slab = jnp.transpose(x0.astype(f32), (2, 1, 0)).reshape(L * C, R)  # [dd*C+c, l] = x0[l,c,dd]
    sp_a = jax.nn.softplus(alpha_prime.astype(f32))
    alpha_t = sp_a.T                                                 # (C, R), > 0
    fbeta_t = (-sp_a + jax.nn.softplus(beta_prime.astype(f32))).T    # (C, R), > -alpha
    logp_col = jnp.log(global_p_c.astype(f32)).reshape(C, 1)         # (C, 1)

    ori_zT, betaT, alphaT = pl.pallas_call(
        _tokenlevel_alpha_kernel,
        grid=grid,
        in_specs=[
            pl.BlockSpec((Ht, tile_n), lambda i: (0, i)),            # hT
            pl.BlockSpec((L, Ht), lambda i: (0, 0)),                 # wT
            pl.BlockSpec((L, 1), lambda i: (0, 0)),                  # bT
            pl.BlockSpec((L * C, Ht), lambda i: (0, 0)),             # w (class-replicated)
            pl.BlockSpec((L * C, 1), lambda i: (0, 0)),              # b (class-replicated)
            pl.BlockSpec((L * C, R), lambda i: (0, 0)),              # x0 slab
            pl.BlockSpec((C, R), lambda i: (0, 0)),                  # softplus(alpha')
            pl.BlockSpec((C, R), lambda i: (0, 0)),                  # -alpha + softplus(beta')
            pl.BlockSpec((C, 1), lambda i: (0, 0)),                  # log p_c
        ],
        out_specs=(
            pl.BlockSpec((L, tile_n), lambda i: (0, i)),
            pl.BlockSpec((C, tile_n), lambda i: (0, i)),
            pl.BlockSpec((C, tile_n), lambda i: (0, i)),
        ),
        out_shape=(
            jax.ShapeDtypeStruct((L, n_pad), f32),
            jax.ShapeDtypeStruct((C, n_pad), f32),
            jax.ShapeDtypeStruct((C, n_pad), f32),
        ),
        compiler_params=pltpu.CompilerParams(
            dimension_semantics=("parallel",)),
    )(hT, wT, bT, wrep, brep, x0_slab, alpha_t, fbeta_t, logp_col)

    # transpose back to the module's output contract
    ori_z = ori_zT[:, :N].T.reshape(Bt, St, L)
    beta_ft = betaT[:, :N].T.reshape(Bt, St, C)
    alpha_feat = alphaT[:, :N].T.reshape(Bt, St, C)
    return alpha_feat, beta_ft, ori_z


def _reference_forward(h, w_enc, b_enc, x0, alpha_prime, beta_prime, p_c):
    """Pure-JAX reference of the same math (for a sanity check)."""
    Bt, St, Ht = h.shape
    z = h.reshape(Bt * St, Ht) @ w_enc + b_enc           # (N, L)
    d = z.shape[-1]
    alpha = jax.nn.softplus(alpha_prime)
    fbeta = -alpha + jax.nn.softplus(beta_prime)
    zc = jnp.broadcast_to(z[None], (NUM_CLASSES,) + z.shape)          # (C, N, L)
    sum_log_det = jnp.zeros((NUM_CLASSES, z.shape[0], 1), jnp.float32)
    for l in range(RADIAL_LAYERS):
        x0_l = x0[l][:, None, :]
        a = alpha[l][:, None, None]
        bt = fbeta[l][:, None, None]
        diff = zc - x0_l
        r = jnp.sqrt(jnp.sum(diff * diff, axis=-1, keepdims=True))
        hh = 1.0 / (a + r)
        beta_h = bt * hh
        zc = zc + beta_h * diff
        sum_log_det = sum_log_det + ((d - 1) * jnp.log1p(beta_h)
                                     + jnp.log1p(beta_h - bt * hh * hh * r))
    log_base = (-0.5 * d * math.log(2.0 * math.pi)
                - 0.5 * jnp.sum(zc * zc, axis=-1, keepdims=True))
    flow_res = (log_base + sum_log_det)[..., 0].T        # (N, C)
    log_q = flow_res + jnp.log(p_c)[None, :]
    scaled = jnp.clip(log_q + 0.5 * d * math.log(4.0 * math.pi), -30.0, 30.0)
    beta_ft = jnp.exp(scaled).reshape(Bt, St, NUM_CLASSES)
    return 1.0 + beta_ft, beta_ft, z.reshape(Bt, St, DIM_LATENT)


if __name__ == "__main__":
    key = jax.random.PRNGKey(0)
    k_h, k_w, k_b, k_x0, k_a, k_bp, k_p = jax.random.split(key, 7)

    # inputs
    h = jax.random.normal(k_h, (BATCH, SEQ_LEN, DIM_HIDDEN), jnp.float32)
    p_c = jax.random.uniform(k_p, (NUM_CLASSES,), jnp.float32, 0.1, 1.0)
    p_c = p_c / jnp.sum(p_c)                                      # global_p_c
    global_n_c = jnp.arange(1, NUM_CLASSES + 1, dtype=jnp.int32)  # unused (normalize_dis=1)

    # deterministic parameter init (nn.Linear / radial-flow style uniforms)
    kw = 1.0 / math.sqrt(DIM_HIDDEN)
    w_enc = jax.random.uniform(k_w, (DIM_HIDDEN, DIM_LATENT), jnp.float32, -kw, kw)
    b_enc = jax.random.uniform(k_b, (DIM_LATENT,), jnp.float32, -kw, kw)
    kf = 1.0 / math.sqrt(DIM_LATENT)
    x0 = jax.random.uniform(k_x0, (RADIAL_LAYERS, NUM_CLASSES, DIM_LATENT),
                            jnp.float32, -kf, kf)
    alpha_prime = jax.random.uniform(k_a, (RADIAL_LAYERS, NUM_CLASSES),
                                     jnp.float32, -kf, kf)
    beta_prime = jax.random.uniform(k_bp, (RADIAL_LAYERS, NUM_CLASSES),
                                    jnp.float32, -kf, kf)

    fwd = jax.jit(token_level_alpha_forward)   # fuses the wrapper-side layout ops
    alpha_feat, beta_ft, ori_z = fwd(
        h, global_n_c, p_c, w_enc, b_enc, x0, alpha_prime, beta_prime)
    jax.block_until_ready((alpha_feat, beta_ft, ori_z))

    ref_alpha, ref_beta, ref_z = _reference_forward(
        h, w_enc, b_enc, x0, alpha_prime, beta_prime, p_c)
    np.testing.assert_allclose(np.asarray(ori_z), np.asarray(ref_z),
                               rtol=5e-3, atol=1e-5)
    np.testing.assert_allclose(np.asarray(beta_ft), np.asarray(ref_beta),
                               rtol=5e-3, atol=1e-5)
    np.testing.assert_allclose(np.asarray(alpha_feat), np.asarray(ref_alpha),
                               rtol=5e-3, atol=1e-5)
    print("KERNEL_OK")
</pallas_src>

<mosaic_0001>
module attributes {stable_mosaic.version = 11 : i64} {
  func.func @_tokenlevel_alpha_kernel(%arg0: i32, %arg1: memref<32x128xf32, #tpu.memory_space<vmem>>, %arg2: memref<8x32xf32, #tpu.memory_space<vmem>>, %arg3: memref<8x1xf32, #tpu.memory_space<vmem>>, %arg4: memref<64x32xf32, #tpu.memory_space<vmem>>, %arg5: memref<64x1xf32, #tpu.memory_space<vmem>>, %arg6: memref<64x3xf32, #tpu.memory_space<vmem>>, %arg7: memref<8x3xf32, #tpu.memory_space<vmem>>, %arg8: memref<8x3xf32, #tpu.memory_space<vmem>>, %arg9: memref<8x1xf32, #tpu.memory_space<vmem>>, %arg10: memref<8x128xf32, #tpu.memory_space<vmem>>, %arg11: memref<8x128xf32, #tpu.memory_space<vmem>>, %arg12: memref<8x128xf32, #tpu.memory_space<vmem>>) attributes {dimension_semantics = [#tpu.dimension_semantics<parallel>], iteration_bounds = array<i64: 1>, scalar_prefetch = 0 : i64, scratch_operands = 0 : i64, tpu.core_type = #tpu.core_type<tc>, window_params = [{transform_indices = @transform_0, window_bounds = array<i64: 32, 128>}, {pipeline_mode = #tpu.pipeline_mode<synchronous>, transform_indices = @transform_1, window_bounds = array<i64: 8, 32>}, {pipeline_mode = #tpu.pipeline_mode<synchronous>, transform_indices = @transform_2, window_bounds = array<i64: 8, 1>}, {pipeline_mode = #tpu.pipeline_mode<synchronous>, transform_indices = @transform_3, window_bounds = array<i64: 64, 32>}, {pipeline_mode = #tpu.pipeline_mode<synchronous>, transform_indices = @transform_4, window_bounds = array<i64: 64, 1>}, {pipeline_mode = #tpu.pipeline_mode<synchronous>, transform_indices = @transform_5, window_bounds = array<i64: 64, 3>}, {pipeline_mode = #tpu.pipeline_mode<synchronous>, transform_indices = @transform_6, window_bounds = array<i64: 8, 3>}, {pipeline_mode = #tpu.pipeline_mode<synchronous>, transform_indices = @transform_7, window_bounds = array<i64: 8, 3>}, {pipeline_mode = #tpu.pipeline_mode<synchronous>, transform_indices = @transform_8, window_bounds = array<i64: 8, 1>}, {transform_indices = @transform_9, window_bounds = array<i64: 8, 128>}, {transform_indices = @transform_10, window_bounds = array<i64: 8, 128>}, {transform_indices = @transform_11, window_bounds = array<i64: 8, 128>}]} {
    %c0 = arith.constant 0 : index
    %c0_0 = arith.constant 0 : index
    %0 = vector.load %arg2[%c0, %c0_0] : memref<8x32xf32, #tpu.memory_space<vmem>>, vector<8x32xf32>
    %c0_1 = arith.constant 0 : index
    %c0_2 = arith.constant 0 : index
    %1 = vector.load %arg1[%c0_1, %c0_2] : memref<32x128xf32, #tpu.memory_space<vmem>>, vector<32x128xf32>
    %cst = arith.constant dense<0.000000e+00> : vector<8x128xf32>
    %2 = tpu.matmul %0, %1, %cst {dimension_numbers = #tpu.dot_dimension_numbers<[1], [0], [0], [1], [0, 0, 1, 1], [], []>} : vector<8x32xf32>, vector<32x128xf32>, vector<8x128xf32> -> vector<8x128xf32>
    %c0_3 = arith.constant 0 : index
    %c0_4 = arith.constant 0 : index
    %3 = vector.load %arg3[%c0_3, %c0_4] : memref<8x1xf32, #tpu.memory_space<vmem>>, vector<8x1xf32>
    %4 = vector.broadcast %3 : vector<8x1xf32> to vector<8x128xf32>
    %5 = arith.addf %2, %4 : vector<8x128xf32>
    %c0_5 = arith.constant 0 : index
    %c0_6 = arith.constant 0 : index
    %6 = vector.load %arg10[%c0_5, %c0_6] : memref<8x128xf32, #tpu.memory_space<vmem>>, vector<8x128xf32>
    tpu.vector_store %arg10[%c0_5, %c0_6], %5 {strides = array<i32>} : memref<8x128xf32, #tpu.memory_space<vmem>>, vector<8x128xf32>,
    %c0_7 = arith.constant 0 : index
    %c0_8 = arith.constant 0 : index
    %7 = vector.load %arg4[%c0_7, %c0_8] : memref<64x32xf32, #tpu.memory_space<vmem>>, vector<64x32xf32>
    %c0_9 = arith.constant 0 : index
    %c0_10 = arith.constant 0 : index
    %8 = vector.load %arg1[%c0_9, %c0_10] : memref<32x128xf32, #tpu.memory_space<vmem>>, vector<32x128xf32>
    %cst_11 = arith.constant dense<0.000000e+00> : vector<64x128xf32>
    %9 = tpu.matmul %7, %8, %cst_11 {dimension_numbers = #tpu.dot_dimension_numbers<[1], [0], [0], [1], [0, 0, 1, 1], [], []>} : vector<64x32xf32>, vector<32x128xf32>, vector<64x128xf32> -> vector<64x128xf32>
    %c0_12 = arith.constant 0 : index
    %c0_13 = arith.constant 0 : index
    %10 = vector.load %arg5[%c0_12, %c0_13] : memref<64x1xf32, #tpu.memory_space<vmem>>, vector<64x1xf32>
    %11 = vector.broadcast %10 : vector<64x1xf32> to vector<64x128xf32>
    %12 = arith.addf %9, %11 : vector<64x128xf32>
    %13 = vector.extract_strided_slice %12 {offsets = [0, 0], sizes = [8, 128], strides = [1, 1]} : vector<64x128xf32> to vector<8x128xf32>
    %14 = vector.extract_strided_slice %12 {offsets = [8, 0], sizes = [8, 128], strides = [1, 1]} : vector<64x128xf32> to vector<8x128xf32>
    %15 = vector.extract_strided_slice %12 {offsets = [16, 0], sizes = [8, 128], strides = [1, 1]} : vector<64x128xf32> to vector<8x128xf32>
    %16 = vector.extract_strided_slice %12 {offsets = [24, 0], sizes = [8, 128], strides = [1, 1]} : vector<64x128xf32> to vector<8x128xf32>
    %17 = vector.extract_strided_slice %12 {offsets = [32, 0], sizes = [8, 128], strides = [1, 1]} : vector<64x128xf32> to vector<8x128xf32>
    %18 = vector.extract_strided_slice %12 {offsets = [40, 0], sizes = [8, 128], strides = [1, 1]} : vector<64x128xf32> to vector<8x128xf32>
    %19 = vector.extract_strided_slice %12 {offsets = [48, 0], sizes = [8, 128], strides = [1, 1]} : vector<64x128xf32> to vector<8x128xf32>
    %20 = vector.extract_strided_slice %12 {offsets = [56, 0], sizes = [8, 128], strides = [1, 1]} : vector<64x128xf32> to vector<8x128xf32>
    %c0_14 = arith.constant 0 : index
    %c0_15 = arith.constant 0 : index
    %21 = vector.load %arg7[%c0_14, %c0_15] : memref<8x3xf32, #tpu.memory_space<vmem>>, vector<8x1xf32>
    %c0_16 = arith.constant 0 : index
    %c0_17 = arith.constant 0 : index
    %22 = vector.load %arg8[%c0_16, %c0_17] : memref<8x3xf32, #tpu.memory_space<vmem>>, vector<8x1xf32>
    %c0_18 = arith.constant 0 : index
    %c0_19 = arith.constant 0 : index
    %23 = vector.load %arg6[%c0_18, %c0_19] : memref<64x3xf32, #tpu.memory_space<vmem>>, vector<8x1xf32>
    %24 = vector.broadcast %23 : vector<8x1xf32> to vector<8x128xf32>
    %25 = arith.subf %13, %24 : vector<8x128xf32>
    %c8 = arith.constant 8 : index
    %c0_20 = arith.constant 0 : index
    %26 = vector.load %arg6[%c8, %c0_20] : memref<64x3xf32, #tpu.memory_space<vmem>>, vector<8x1xf32>
    %27 = vector.broadcast %26 : vector<8x1xf32> to vector<8x128xf32>
    %28 = arith.subf %14, %27 : vector<8x128xf32>
    %c16 = arith.constant 16 : index
    %c0_21 = arith.constant 0 : index
    %29 = vector.load %arg6[%c16, %c0_21] : memref<64x3xf32, #tpu.memory_space<vmem>>, vector<8x1xf32>
    %30 = vector.broadcast %29 : vector<8x1xf32> to vector<8x128xf32>
    %31 = arith.subf %15, %30 : vector<8x128xf32>
    %c24 = arith.constant 24 : index
    %c0_22 = arith.constant 0 : index
    %32 = vector.load %arg6[%c24, %c0_22] : memref<64x3xf32, #tpu.memory_space<vmem>>, vector<8x1xf32>
    %33 = vector.broadcast %32 : vector<8x1xf32> to vector<8x128xf32>
    %34 = arith.subf %16, %33 : vector<8x128xf32>
    %c32 = arith.constant 32 : index
    %c0_23 = arith.constant 0 : index
    %35 = vector.load %arg6[%c32, %c0_23] : memref<64x3xf32, #tpu.memory_space<vmem>>, vector<8x1xf32>
    %36 = vector.broadcast %35 : vector<8x1xf32> to vector<8x128xf32>
    %37 = arith.subf %17, %36 : vector<8x128xf32>
    %c40 = arith.constant 40 : index
    %c0_24 = arith.constant 0 : index
    %38 = vector.load %arg6[%c40, %c0_24] : memref<64x3xf32, #tpu.memory_space<vmem>>, vector<8x1xf32>
    %39 = vector.broadcast %38 : vector<8x1xf32> to vector<8x128xf32>
    %40 = arith.subf %18, %39 : vector<8x128xf32>
    %c48 = arith.constant 48 : index
    %c0_25 = arith.constant 0 : index
    %41 = vector.load %arg6[%c48, %c0_25] : memref<64x3xf32, #tpu.memory_space<vmem>>, vector<8x1xf32>
    %42 = vector.broadcast %41 : vector<8x1xf32> to vector<8x128xf32>
    %43 = arith.subf %19, %42 : vector<8x128xf32>
    %c56 = arith.constant 56 : index
    %c0_26 = arith.constant 0 : index
    %44 = vector.load %arg6[%c56, %c0_26] : memref<64x3xf32, #tpu.memory_space<vmem>>, vector<8x1xf32>
    %45 = vector.broadcast %44 : vector<8x1xf32> to vector<8x128xf32>
    %46 = arith.subf %20, %45 : vector<8x128xf32>
    %47 = arith.mulf %25, %25 : vector<8x128xf32>
    %48 = arith.mulf %28, %28 : vector<8x128xf32>
    %49 = arith.addf %47, %48 : vector<8x128xf32>
    %50 = arith.mulf %31, %31 : vector<8x128xf32>
    %51 = arith.addf %49, %50 : vector<8x128xf32>
    %52 = arith.mulf %34, %34 : vector<8x128xf32>
    %53 = arith.addf %51, %52 : vector<8x128xf32>
    %54 = arith.mulf %37, %37 : vector<8x128xf32>
    %55 = arith.addf %53, %54 : vector<8x128xf32>
    %56 = arith.mulf %40, %40 : vector<8x128xf32>
    %57 = arith.addf %55, %56 : vector<8x128xf32>
    %58 = arith.mulf %43, %43 : vector<8x128xf32>
    %59 = arith.addf %57, %58 : vector<8x128xf32>
    %60 = arith.mulf %46, %46 : vector<8x128xf32>
    %61 = arith.addf %59, %60 : vector<8x128xf32>
    %62 = math.sqrt %61 : vector<8x128xf32>
    %63 = vector.broadcast %21 : vector<8x1xf32> to vector<8x128xf32>
    %64 = arith.addf %63, %62 : vector<8x128xf32>
    %65 = tpu.reciprocal %64 {approx = true} : vector<8x128xf32> -> vector<8x128xf32>
    %66 = vector.broadcast %22 : vector<8x1xf32> to vector<8x128xf32>
    %67 = arith.mulf %66, %65 : vector<8x128xf32>
    %68 = arith.mulf %67, %25 : vector<8x128xf32>
    %69 = arith.addf %13, %68 : vector<8x128xf32>
    %70 = arith.mulf %67, %28 : vector<8x128xf32>
    %71 = arith.addf %14, %70 : vector<8x128xf32>
    %72 = arith.mulf %67, %31 : vector<8x128xf32>
    %73 = arith.addf %15, %72 : vector<8x128xf32>
    %74 = arith.mulf %67, %34 : vector<8x128xf32>
    %75 = arith.addf %16, %74 : vector<8x128xf32>
    %76 = arith.mulf %67, %37 : vector<8x128xf32>
    %77 = arith.addf %17, %76 : vector<8x128xf32>
    %78 = arith.mulf %67, %40 : vector<8x128xf32>
    %79 = arith.addf %18, %78 : vector<8x128xf32>
    %80 = arith.mulf %67, %43 : vector<8x128xf32>
    %81 = arith.addf %19, %80 : vector<8x128xf32>
    %82 = arith.mulf %67, %46 : vector<8x128xf32>
    %83 = arith.addf %20, %82 : vector<8x128xf32>
    %cst_27 = arith.constant 1.000000e+00 : f32
    %84 = vector.broadcast %cst_27 : f32 to vector<8x128xf32>
    %85 = arith.addf %84, %67 : vector<8x128xf32>
    %86 = arith.mulf %85, %85 : vector<8x128xf32>
    %87 = arith.mulf %85, %86 : vector<8x128xf32>
    %88 = arith.mulf %86, %86 : vector<8x128xf32>
    %89 = arith.mulf %87, %88 : vector<8x128xf32>
    %90 = vector.broadcast %21 : vector<8x1xf32> to vector<8x128xf32>
    %91 = arith.mulf %90, %65 : vector<8x128xf32>
    %92 = arith.mulf %67, %91 : vector<8x128xf32>
    %cst_28 = arith.constant 1.000000e+00 : f32
    %93 = vector.broadcast %cst_28 : f32 to vector<8x128xf32>
    %94 = arith.addf %93, %92 : vector<8x128xf32>
    %95 = arith.mulf %89, %94 : vector<8x128xf32>
    %96 = math.log %95 : vector<8x128xf32>
    %c0_29 = arith.constant 0 : index
    %c1 = arith.constant 1 : index
    %97 = vector.load %arg7[%c0_29, %c1] : memref<8x3xf32, #tpu.memory_space<vmem>>, vector<8x1xf32>
    %c0_30 = arith.constant 0 : index
    %c1_31 = arith.constant 1 : index
    %98 = vector.load %arg8[%c0_30, %c1_31] : memref<8x3xf32, #tpu.memory_space<vmem>>, vector<8x1xf32>
    %c0_32 = arith.constant 0 : index
    %c1_33 = arith.constant 1 : index
    %99 = vector.load %arg6[%c0_32, %c1_33] : memref<64x3xf32, #tpu.memory_space<vmem>>, vector<8x1xf32>
    %100 = vector.broadcast %99 : vector<8x1xf32> to vector<8x128xf32>
    %101 = arith.subf %69, %100 : vector<8x128xf32>
    %c8_34 = arith.constant 8 : index
    %c1_35 = arith.constant 1 : index
    %102 = vector.load %arg6[%c8_34, %c1_35] : memref<64x3xf32, #tpu.memory_space<vmem>>, vector<8x1xf32>
    %103 = vector.broadcast %102 : vector<8x1xf32> to vector<8x128xf32>
    %104 = arith.subf %71, %103 : vector<8x128xf32>
    %c16_36 = arith.constant 16 : index
    %c1_37 = arith.constant 1 : index
    %105 = vector.load %arg6[%c16_36, %c1_37] : memref<64x3xf32, #tpu.memory_space<vmem>>, vector<8x1xf32>
    %106 = vector.broadcast %105 : vector<8x1xf32> to vector<8x128xf32>
    %107 = arith.subf %73, %106 : vector<8x128xf32>
    %c24_38 = arith.constant 24 : index
    %c1_39 = arith.constant 1 : index
    %108 = vector.load %arg6[%c24_38, %c1_39] : memref<64x3xf32, #tpu.memory_space<vmem>>, vector<8x1xf32>
    %109 = vector.broadcast %108 : vector<8x1xf32> to vector<8x128xf32>
    %110 = arith.subf %75, %109 : vector<8x128xf32>
    %c32_40 = arith.constant 32 : index
    %c1_41 = arith.constant 1 : index
    %111 = vector.load %arg6[%c32_40, %c1_41] : memref<64x3xf32, #tpu.memory_space<vmem>>, vector<8x1xf32>
    %112 = vector.broadcast %111 : vector<8x1xf32> to vector<8x128xf32>
    %113 = arith.subf %77, %112 : vector<8x128xf32>
    %c40_42 = arith.constant 40 : index
    %c1_43 = arith.constant 1 : index
    %114 = vector.load %arg6[%c40_42, %c1_43] : memref<64x3xf32, #tpu.memory_space<vmem>>, vector<8x1xf32>
    %115 = vector.broadcast %114 : vector<8x1xf32> to vector<8x128xf32>
    %116 = arith.subf %79, %115 : vector<8x128xf32>
    %c48_44 = arith.constant 48 : index
    %c1_45 = arith.constant 1 : index
    %117 = vector.load %arg6[%c48_44, %c1_45] : memref<64x3xf32, #tpu.memory_space<vmem>>, vector<8x1xf32>
    %118 = vector.broadcast %117 : vector<8x1xf32> to vector<8x128xf32>
    %119 = arith.subf %81, %118 : vector<8x128xf32>
    %c56_46 = arith.constant 56 : index
    %c1_47 = arith.constant 1 : index
    %120 = vector.load %arg6[%c56_46, %c1_47] : memref<64x3xf32, #tpu.memory_space<vmem>>, vector<8x1xf32>
    %121 = vector.broadcast %120 : vector<8x1xf32> to vector<8x128xf32>
    %122 = arith.subf %83, %121 : vector<8x128xf32>
    %123 = arith.mulf %101, %101 : vector<8x128xf32>
    %124 = arith.mulf %104, %104 : vector<8x128xf32>
    %125 = arith.addf %123, %124 : vector<8x128xf32>
    %126 = arith.mulf %107, %107 : vector<8x128xf32>
    %127 = arith.addf %125, %126 : vector<8x128xf32>
    %128 = arith.mulf %110, %110 : vector<8x128xf32>
    %129 = arith.addf %127, %128 : vector<8x128xf32>
    %130 = arith.mulf %113, %113 : vector<8x128xf32>
    %131 = arith.addf %129, %130 : vector<8x128xf32>
    %132 = arith.mulf %116, %116 : vector<8x128xf32>
    %133 = arith.addf %131, %132 : vector<8x128xf32>
    %134 = arith.mulf %119, %119 : vector<8x128xf32>
    %135 = arith.addf %133, %134 : vector<8x128xf32>
    %136 = arith.mulf %122, %122 : vector<8x128xf32>
    %137 = arith.addf %135, %136 : vector<8x128xf32>
    %138 = math.sqrt %137 : vector<8x128xf32>
    %139 = vector.broadcast %97 : vector<8x1xf32> to vector<8x128xf32>
    %140 = arith.addf %139, %138 : vector<8x128xf32>
    %141 = tpu.reciprocal %140 {approx = true} : vector<8x128xf32> -> vector<8x128xf32>
    %142 = vector.broadcast %98 : vector<8x1xf32> to vector<8x128xf32>
    %143 = arith.mulf %142, %141 : vector<8x128xf32>
    %144 = arith.mulf %143, %101 : vector<8x128xf32>
    %145 = arith.addf %69, %144 : vector<8x128xf32>
    %146 = arith.mulf %143, %104 : vector<8x128xf32>
    %147 = arith.addf %71, %146 : vector<8x128xf32>
    %148 = arith.mulf %143, %107 : vector<8x128xf32>
    %149 = arith.addf %73, %148 : vector<8x128xf32>
    %150 = arith.mulf %143, %110 : vector<8x128xf32>
    %151 = arith.addf %75, %150 : vector<8x128xf32>
    %152 = arith.mulf %143, %113 : vector<8x128xf32>
    %153 = arith.addf %77, %152 : vector<8x128xf32>
    %154 = arith.mulf %143, %116 : vector<8x128xf32>
    %155 = arith.addf %79, %154 : vector<8x128xf32>
    %156 = arith.mulf %143, %119 : vector<8x128xf32>
    %157 = arith.addf %81, %156 : vector<8x128xf32>
    %158 = arith.mulf %143, %122 : vector<8x128xf32>
    %159 = arith.addf %83, %158 : vector<8x128xf32>
    %cst_48 = arith.constant 1.000000e+00 : f32
    %160 = vector.broadcast %cst_48 : f32 to vector<8x128xf32>
    %161 = arith.addf %160, %143 : vector<8x128xf32>
    %162 = arith.mulf %161, %161 : vector<8x128xf32>
    %163 = arith.mulf %161, %162 : vector<8x128xf32>
    %164 = arith.mulf %162, %162 : vector<8x128xf32>
    %165 = arith.mulf %163, %164 : vector<8x128xf32>
    %166 = vector.broadcast %97 : vector<8x1xf32> to vector<8x128xf32>
    %167 = arith.mulf %166, %141 : vector<8x128xf32>
    %168 = arith.mulf %143, %167 : vector<8x128xf32>
    %cst_49 = arith.constant 1.000000e+00 : f32
    %169 = vector.broadcast %cst_49 : f32 to vector<8x128xf32>
    %170 = arith.addf %169, %168 : vector<8x128xf32>
    %171 = arith.mulf %165, %170 : vector<8x128xf32>
    %172 = math.log %171 : vector<8x128xf32>
    %173 = arith.addf %96, %172 : vector<8x128xf32>
    %c0_50 = arith.constant 0 : index
    %c2 = arith.constant 2 : index
    %174 = vector.load %arg7[%c0_50, %c2] : memref<8x3xf32, #tpu.memory_space<vmem>>, vector<8x1xf32>
    %c0_51 = arith.constant 0 : index
    %c2_52 = arith.constant 2 : index
    %175 = vector.load %arg8[%c0_51, %c2_52] : memref<8x3xf32, #tpu.memory_space<vmem>>, vector<8x1xf32>
    %c0_53 = arith.constant 0 : index
    %c2_54 = arith.constant 2 : index
    %176 = vector.load %arg6[%c0_53, %c2_54] : memref<64x3xf32, #tpu.memory_space<vmem>>, vector<8x1xf32>
    %177 = vector.broadcast %176 : vector<8x1xf32> to vector<8x128xf32>
    %178 = arith.subf %145, %177 : vector<8x128xf32>
    %c8_55 = arith.constant 8 : index
    %c2_56 = arith.constant 2 : index
    %179 = vector.load %arg6[%c8_55, %c2_56] : memref<64x3xf32, #tpu.memory_space<vmem>>, vector<8x1xf32>
    %180 = vector.broadcast %179 : vector<8x1xf32> to vector<8x128xf32>
    %181 = arith.subf %147, %180 : vector<8x128xf32>
    %c16_57 = arith.constant 16 : index
    %c2_58 = arith.constant 2 : index
    %182 = vector.load %arg6[%c16_57, %c2_58] : memref<64x3xf32, #tpu.memory_space<vmem>>, vector<8x1xf32>
    %183 = vector.broadcast %182 : vector<8x1xf32> to vector<8x128xf32>
    %184 = arith.subf %149, %183 : vector<8x128xf32>
    %c24_59 = arith.constant 24 : index
    %c2_60 = arith.constant 2 : index
    %185 = vector.load %arg6[%c24_59, %c2_60] : memref<64x3xf32, #tpu.memory_space<vmem>>, vector<8x1xf32>
    %186 = vector.broadcast %185 : vector<8x1xf32> to vector<8x128xf32>
    %187 = arith.subf %151, %186 : vector<8x128xf32>
    %c32_61 = arith.constant 32 : index
    %c2_62 = arith.constant 2 : index
    %188 = vector.load %arg6[%c32_61, %c2_62] : memref<64x3xf32, #tpu.memory_space<vmem>>, vector<8x1xf32>
    %189 = vector.broadcast %188 : vector<8x1xf32> to vector<8x128xf32>
    %190 = arith.subf %153, %189 : vector<8x128xf32>
    %c40_63 = arith.constant 40 : index
    %c2_64 = arith.constant 2 : index
    %191 = vector.load %arg6[%c40_63, %c2_64] : memref<64x3xf32, #tpu.memory_space<vmem>>, vector<8x1xf32>
    %192 = vector.broadcast %191 : vector<8x1xf32> to vector<8x128xf32>
    %193 = arith.subf %155, %192 : vector<8x128xf32>
    %c48_65 = arith.constant 48 : index
    %c2_66 = arith.constant 2 : index
    %194 = vector.load %arg6[%c48_65, %c2_66] : memref<64x3xf32, #tpu.memory_space<vmem>>, vector<8x1xf32>
    %195 = vector.broadcast %194 : vector<8x1xf32> to vector<8x128xf32>
    %196 = arith.subf %157, %195 : vector<8x128xf32>
    %c56_67 = arith.constant 56 : index
    %c2_68 = arith.constant 2 : index
    %197 = vector.load %arg6[%c56_67, %c2_68] : memref<64x3xf32, #tpu.memory_space<vmem>>, vector<8x1xf32>
    %198 = vector.broadcast %197 : vector<8x1xf32> to vector<8x128xf32>
    %199 = arith.subf %159, %198 : vector<8x128xf32>
    %200 = arith.mulf %178, %178 : vector<8x128xf32>
    %201 = arith.mulf %181, %181 : vector<8x128xf32>
    %202 = arith.addf %200, %201 : vector<8x128xf32>
    %203 = arith.mulf %184, %184 : vector<8x128xf32>
    %204 = arith.addf %202, %203 : vector<8x128xf32>
    %205 = arith.mulf %187, %187 : vector<8x128xf32>
    %206 = arith.addf %204, %205 : vector<8x128xf32>
    %207 = arith.mulf %190, %190 : vector<8x128xf32>
    %208 = arith.addf %206, %207 : vector<8x128xf32>
    %209 = arith.mulf %193, %193 : vector<8x128xf32>
    %210 = arith.addf %208, %209 : vector<8x128xf32>
    %211 = arith.mulf %196, %196 : vector<8x128xf32>
    %212 = arith.addf %210, %211 : vector<8x128xf32>
    %213 = arith.mulf %199, %199 : vector<8x128xf32>
    %214 = arith.addf %212, %213 : vector<8x128xf32>
    %215 = math.sqrt %214 : vector<8x128xf32>
    %216 = vector.broadcast %174 : vector<8x1xf32> to vector<8x128xf32>
    %217 = arith.addf %216, %215 : vector<8x128xf32>
    %218 = tpu.reciprocal %217 {approx = true} : vector<8x128xf32> -> vector<8x128xf32>
    %219 = vector.broadcast %175 : vector<8x1xf32> to vector<8x128xf32>
    %220 = arith.mulf %219, %218 : vector<8x128xf32>
    %221 = arith.mulf %220, %178 : vector<8x128xf32>
    %222 = arith.addf %145, %221 : vector<8x128xf32>
    %223 = arith.mulf %220, %181 : vector<8x128xf32>
    %224 = arith.addf %147, %223 : vector<8x128xf32>
    %225 = arith.mulf %220, %184 : vector<8x128xf32>
    %226 = arith.addf %149, %225 : vector<8x128xf32>
    %227 = arith.mulf %220, %187 : vector<8x128xf32>
    %228 = arith.addf %151, %227 : vector<8x128xf32>
    %229 = arith.mulf %220, %190 : vector<8x128xf32>
    %230 = arith.addf %153, %229 : vector<8x128xf32>
    %231 = arith.mulf %220, %193 : vector<8x128xf32>
    %232 = arith.addf %155, %231 : vector<8x128xf32>
    %233 = arith.mulf %220, %196 : vector<8x128xf32>
    %234 = arith.addf %157, %233 : vector<8x128xf32>
    %235 = arith.mulf %220, %199 : vector<8x128xf32>
    %236 = arith.addf %159, %235 : vector<8x128xf32>
    %cst_69 = arith.constant 1.000000e+00 : f32
    %237 = vector.broadcast %cst_69 : f32 to vector<8x128xf32>
    %238 = arith.addf %237, %220 : vector<8x128xf32>
    %239 = arith.mulf %238, %238 : vector<8x128xf32>
    %240 = arith.mulf %238, %239 : vector<8x128xf32>
    %241 = arith.mulf %239, %239 : vector<8x128xf32>
    %242 = arith.mulf %240, %241 : vector<8x128xf32>
    %243 = vector.broadcast %174 : vector<8x1xf32> to vector<8x128xf32>
    %244 = arith.mulf %243, %218 : vector<8x128xf32>
    %245 = arith.mulf %220, %244 : vector<8x128xf32>
    %cst_70 = arith.constant 1.000000e+00 : f32
    %246 = vector.broadcast %cst_70 : f32 to vector<8x128xf32>
    %247 = arith.addf %246, %245 : vector<8x128xf32>
    %248 = arith.mulf %242, %247 : vector<8x128xf32>
    %249 = math.log %248 : vector<8x128xf32>
    %250 = arith.addf %173, %249 : vector<8x128xf32>
    %251 = arith.mulf %222, %222 : vector<8x128xf32>
    %252 = arith.mulf %224, %224 : vector<8x128xf32>
    %253 = arith.addf %251, %252 : vector<8x128xf32>
    %254 = arith.mulf %226, %226 : vector<8x128xf32>
    %255 = arith.addf %253, %254 : vector<8x128xf32>
    %256 = arith.mulf %228, %228 : vector<8x128xf32>
    %257 = arith.addf %255, %256 : vector<8x128xf32>
    %258 = arith.mulf %230, %230 : vector<8x128xf32>
    %259 = arith.addf %257, %258 : vector<8x128xf32>
    %260 = arith.mulf %232, %232 : vector<8x128xf32>
    %261 = arith.addf %259, %260 : vector<8x128xf32>
    %262 = arith.mulf %234, %234 : vector<8x128xf32>
    %263 = arith.addf %261, %262 : vector<8x128xf32>
    %264 = arith.mulf %236, %236 : vector<8x128xf32>
    %265 = arith.addf %263, %264 : vector<8x128xf32>
    %cst_71 = arith.constant 5.000000e-01 : f32
    %266 = vector.broadcast %cst_71 : f32 to vector<8x128xf32>
    %267 = arith.mulf %266, %265 : vector<8x128xf32>
    %cst_72 = arith.constant -7.35150814 : f32
    %268 = vector.broadcast %cst_72 : f32 to vector<8x128xf32>
    %269 = arith.subf %268, %267 : vector<8x128xf32>
    %270 = arith.addf %269, %250 : vector<8x128xf32>
    %c0_73 = arith.constant 0 : index
    %c0_74 = arith.constant 0 : index
    %271 = vector.load %arg9[%c0_73, %c0_74] : memref<8x1xf32, #tpu.memory_space<vmem>>, vector<8x1xf32>
    %272 = vector.broadcast %271 : vector<8x1xf32> to vector<8x128xf32>
    %273 = arith.addf %270, %272 : vector<8x128xf32>
    %cst_75 = arith.constant 10.1240969 : f32
    %274 = vector.broadcast %cst_75 : f32 to vector<8x128xf32>
    %275 = arith.addf %273, %274 : vector<8x128xf32>
    %cst_76 = arith.constant -3.000000e+01 : f32
    %cst_77 = arith.constant 3.000000e+01 : f32
    %276 = vector.broadcast %cst_76 : f32 to vector<8x128xf32>
    %277 = arith.maximumf %276, %275 : vector<8x128xf32>
    %278 = vector.broadcast %cst_77 : f32 to vector<8x128xf32>
    %279 = arith.minimumf %278, %277 : vector<8x128xf32>
    %280 = math.exp %279 : vector<8x128xf32>
    %c0_78 = arith.constant 0 : index
    %c0_79 = arith.constant 0 : index
    %281 = vector.load %arg11[%c0_78, %c0_79] : memref<8x128xf32, #tpu.memory_space<vmem>>, vector<8x128xf32>
    tpu.vector_store %arg11[%c0_78, %c0_79], %280 {strides = array<i32>} : memref<8x128xf32, #tpu.memory_space<vmem>>, vector<8x128xf32>,
    %cst_80 = arith.constant 1.000000e+00 : f32
    %282 = vector.broadcast %cst_80 : f32 to vector<8x128xf32>
    %283 = arith.addf %282, %280 : vector<8x128xf32>
    %c0_81 = arith.constant 0 : index
    %c0_82 = arith.constant 0 : index
    %284 = vector.load %arg12[%c0_81, %c0_82] : memref<8x128xf32, #tpu.memory_space<vmem>>, vector<8x128xf32>
    tpu.vector_store %arg12[%c0_81, %c0_82], %283 {strides = array<i32>} : memref<8x128xf32, #tpu.memory_space<vmem>>, vector<8x128xf32>,
    return
  }
  func.func @transform_0(%arg0: i32) -> (i32, i32) {
    %c0_i32 = arith.constant 0 : i32
    %c0_i32_0 = arith.constant 0 : i32
    return %c0_i32, %arg0 : i32, i32
  }
  func.func @transform_1(%arg0: i32) -> (i32, i32) {
    %c0_i32 = arith.constant 0 : i32
    %c0_i32_0 = arith.constant 0 : i32
    %c0_i32_1 = arith.constant 0 : i32
    return %c0_i32, %c0_i32_0 : i32, i32
  }
  func.func @transform_2(%arg0: i32) -> (i32, i32) {
    %c0_i32 = arith.constant 0 : i32
    %c0_i32_0 = arith.constant 0 : i32
    %c0_i32_1 = arith.constant 0 : i32
    return %c0_i32, %c0_i32_0 : i32, i32
  }
  func.func @transform_3(%arg0: i32) -> (i32, i32) {
    %c0_i32 = arith.constant 0 : i32
    %c0_i32_0 = arith.constant 0 : i32
    %c0_i32_1 = arith.constant 0 : i32
    return %c0_i32, %c0_i32_0 : i32, i32
  }
  func.func @transform_4(%arg0: i32) -> (i32, i32) {
    %c0_i32 = arith.constant 0 : i32
    %c0_i32_0 = arith.constant 0 : i32
    %c0_i32_1 = arith.constant 0 : i32
    return %c0_i32, %c0_i32_0 : i32, i32
  }
  func.func @transform_5(%arg0: i32) -> (i32, i32) {
    %c0_i32 = arith.constant 0 : i32
    %c0_i32_0 = arith.constant 0 : i32
    %c0_i32_1 = arith.constant 0 : i32
    return %c0_i32, %c0_i32_0 : i32, i32
  }
  func.func @transform_6(%arg0: i32) -> (i32, i32) {
    %c0_i32 = arith.constant 0 : i32
    %c0_i32_0 = arith.constant 0 : i32
    %c0_i32_1 = arith.constant 0 : i32
    return %c0_i32, %c0_i32_0 : i32, i32
  }
  func.func @transform_7(%arg0: i32) -> (i32, i32) {
    %c0_i32 = arith.constant 0 : i32
    %c0_i32_0 = arith.constant 0 : i32
    %c0_i32_1 = arith.constant 0 : i32
    return %c0_i32, %c0_i32_0 : i32, i32
  }
  func.func @transform_8(%arg0: i32) -> (i32, i32) {
    %c0_i32 = arith.constant 0 : i32
    %c0_i32_0 = arith.constant 0 : i32
    %c0_i32_1 = arith.constant 0 : i32
    return %c0_i32, %c0_i32_0 : i32, i32
  }
  func.func @transform_9(%arg0: i32) -> (i32, i32) {
    %c0_i32 = arith.constant 0 : i32
    %c0_i32_0 = arith.constant 0 : i32
    return %c0_i32, %arg0 : i32, i32
  }
  func.func @transform_10(%arg0: i32) -> (i32, i32) {
    %c0_i32 = arith.constant 0 : i32
    %c0_i32_0 = arith.constant 0 : i32
    return %c0_i32, %arg0 : i32, i32
  }
  func.func @transform_11(%arg0: i32) -> (i32, i32) {
    %c0_i32 = arith.constant 0 : i32
    %c0_i32_0 = arith.constant 0 : i32
    return %c0_i32, %arg0 : i32, i32
  }
}

</mosaic_0001>

<llo_original>
// kernel: token_level_alpha_forward.1
$region0: #{token_level_alpha_forward.1}
  #allocation0 [shape = 'u32[]', space=smem, size = 0x4, offset = 0x4, fixed_abs, tag = 'smem constant byte address 0x4 - core index']
  #allocation1 [shape = 'u32[144,128]{1,0:T(1,128)}', space=vmem, size = 0x12000, scoped, tag = 'internal scratch']
  %s0 = inlined_call_operand.vmem [shape: f32[32,128], index: 0, kind: input, shape index: {}]
  %s1 = inlined_call_operand.vmem [shape: f32[8,32], index: 1, kind: input, shape index: {}]
  %s2 = inlined_call_operand.vmem [shape: f32[8,1], index: 2, kind: input, shape index: {}]
  %s3 = inlined_call_operand.vmem [shape: f32[64,32], index: 3, kind: input, shape index: {}]
  %s4 = inlined_call_operand.vmem [shape: f32[64,1], index: 4, kind: input, shape index: {}]
  %s5 = inlined_call_operand.vmem [shape: f32[64,3], index: 5, kind: input, shape index: {}]
  %s6 = inlined_call_operand.vmem [shape: f32[8,3], index: 6, kind: input, shape index: {}]
  %s7 = inlined_call_operand.vmem [shape: f32[8,3], index: 7, kind: input, shape index: {}]
  %s8 = inlined_call_operand.vmem [shape: f32[8,1], index: 8, kind: input, shape index: {}]
  %s9 = inlined_call_operand.vmem [shape: f32[8,128], index: 9, kind: output, shape index: {0}]
  %s10 = inlined_call_operand.vmem [shape: f32[8,128], index: 10, kind: output, shape index: {1}]
  %s11 = inlined_call_operand.vmem [shape: f32[8,128], index: 11, kind: output, shape index: {2}]
  %12 = xla_tuple %s9, %s10, %s11
  %s13 = sld [smem:[#allocation0]]
  $region62: #{token_level_alpha_forward.1} parent=0
    _
  %s15 = ssub.s32 1, %s13
  %s16 = scalar_select 0, %s15, %s13
  // Predicated region
  $region2: #{token_level_alpha_forward.1} parent=0 // pred_check
    _
  $region3: #{token_level_alpha_forward.1} parent=0 // pred_check_branch
    %18 = sbr.rel (0) target = $region5
  $region4: #{token_level_alpha_forward.1} parent=0 // pred_region
    _
  $region5: #{token_level_alpha_forward.1} parent=0 // pred_fallthru
    _
  // Predicated region
  $region6: #{token_level_alpha_forward.1} parent=0 // pred_check
    _
  $region7: #{token_level_alpha_forward.1} parent=0 // pred_check_branch
    %20 = sbr.rel (0) target = $region9
  $region8: #{token_level_alpha_forward.1} parent=0 // pred_region
    _
  $region9: #{token_level_alpha_forward.1} parent=0 // pred_fallthru
    _
  // Predicated region
  $region10: #{token_level_alpha_forward.1} parent=0 // pred_check
    _
  $region11: #{token_level_alpha_forward.1} parent=0 // pred_check_branch
    %22 = sbr.rel (0) target = $region13
  $region12: #{token_level_alpha_forward.1} parent=0 // pred_region
    _
  $region13: #{token_level_alpha_forward.1} parent=0 // pred_fallthru
    _
  // Predicated region
  $region14: #{token_level_alpha_forward.1} parent=0 // pred_check
    _
  $region15: #{token_level_alpha_forward.1} parent=0 // pred_check_branch
    %24 = sbr.rel (0) target = $region17
  $region16: #{token_level_alpha_forward.1} parent=0 // pred_region
    _
  $region17: #{token_level_alpha_forward.1} parent=0 // pred_fallthru
    _
  // Predicated region
  $region18: #{token_level_alpha_forward.1} parent=0 // pred_check
    _
  $region19: #{token_level_alpha_forward.1} parent=0 // pred_check_branch
    %26 = sbr.rel (0) target = $region21
  $region20: #{token_level_alpha_forward.1} parent=0 // pred_region
    _
  $region21: #{token_level_alpha_forward.1} parent=0 // pred_fallthru
    _
  // Predicated region
  $region22: #{token_level_alpha_forward.1} parent=0 // pred_check
    _
  $region23: #{token_level_alpha_forward.1} parent=0 // pred_check_branch
    %28 = sbr.rel (0) target = $region25
  $region24: #{token_level_alpha_forward.1} parent=0 // pred_region
    _
  $region25: #{token_level_alpha_forward.1} parent=0 // pred_fallthru
    _
  // Predicated region
  $region26: #{token_level_alpha_forward.1} parent=0 // pred_check
    _
  $region27: #{token_level_alpha_forward.1} parent=0 // pred_check_branch
    %30 = sbr.rel (0) target = $region29
  $region28: #{token_level_alpha_forward.1} parent=0 // pred_region
    _
  $region29: #{token_level_alpha_forward.1} parent=0 // pred_fallthru
    _
  // Predicated region
  $region30: #{token_level_alpha_forward.1} parent=0 // pred_check
    _
  $region31: #{token_level_alpha_forward.1} parent=0 // pred_check_branch
    %32 = sbr.rel (0) target = $region33
  $region32: #{token_level_alpha_forward.1} parent=0 // pred_region
    _
  $region33: #{token_level_alpha_forward.1} parent=0 // pred_fallthru
    _
  // Predicated region
  $region34: #{token_level_alpha_forward.1} parent=0 // pred_check
    _
  $region35: #{token_level_alpha_forward.1} parent=0 // pred_check_branch
    %34 = sbr.rel (0) target = $region37
  $region36: #{token_level_alpha_forward.1} parent=0 // pred_region
    _
  $region37: #{token_level_alpha_forward.1} parent=0 // pred_fallthru
    _
  %v35 = vld [vmem:[%s1] sm:$0xff]
  %v36 = vld [vmem:[%s0] sm:$0xff]
  %v37 = vld [vmem:[%s0 + $0x8] sm:$0xff]
  %v38 = vld [vmem:[%s0 + $0x10] sm:$0xff]
  %v39 = vld [vmem:[%s0 + $0x18] sm:$0xff]
  %v40 = vld [vmem:[%s2] sm:$0xff]
  %42 = vset.pattern.permute.xlu0 0
  %43 = vperm.xlu0 %42, %v40
  %v44 = vpop.permute.xlu0 %43
  %vm46 = vcmask 261120
  %v48 = vsel %vm46, %v35, 0
  %50 = vmatprep.subr.mxu0 0.0
  %51 = vmatpush1.msra.mxu0 %v36
  %52 = vmatprep.subr.mxu0 0.0
  %53 = vmatpush1.msra.mxu0 %v37
  %54 = vmatprep.subr.mxu0 0.0
  %55 = vmatpush1.msra.mxu0 %v38
  %56 = vmatprep.subr.mxu0 0.0
  %57 = vmatpush1.msra.mxu0 %v39
  %58 = vmatprep.subr.mxu0 0.0
  %59 = vmatpush1.msra.mxu0 0.0
  %60 = vmatprep.subr.mxu0 0.0
  %61 = vmatpush1.msra.mxu0 0.0
  %62 = vmatprep.subr.mxu0 0.0
  %63 = vmatpush1.msra.mxu0 0.0
  %64 = vmatprep.subr.mxu0 0.0
  %65 = vmatpush1.msra.mxu0 0.0
  %66 = vmatprep.subr.mxu0 0.0
  %67 = vmatpush1.msra.mxu0 0.0
  %68 = vmatprep.subr.mxu0 0.0
  %69 = vmatpush1.msra.mxu0 0.0
  %70 = vmatprep.subr.mxu0 0.0
  %71 = vmatpush1.msra.mxu0 0.0
  %72 = vmatprep.subr.mxu0 0.0
  %73 = vmatpush1.msra.mxu0 0.0
  %74 = vmatprep.subr.mxu0 0.0
  %75 = vmatpush1.msra.mxu0 0.0
  %76 = vmatprep.subr.mxu0 0.0
  %77 = vmatpush1.msra.mxu0 0.0
  %78 = vmatprep.subr.mxu0 0.0
  %79 = vmatpush1.msra.mxu0 0.0
  %80 = vmatprep.subr.mxu0 0.0
  %81 = vmatpush1.msra.mxu0 0.0
  %82 = vmatprep.subr.mxu0 0.0
  %83 = vmatpush1.msra.mxu0 0.0
  %84 = vmatprep.subr.mxu0 0.0
  %85 = vmatpush1.msra.mxu0 0.0
  %86 = vmatprep.subr.mxu0 0.0
  %87 = vmatpush1.msra.mxu0 0.0
  %88 = vmatprep.subr.mxu0 0.0
  %89 = vmatpush1.msra.mxu0 0.0
  %90 = vmatprep.subr.mxu0 0.0
  %91 = vmatpush1.msra.mxu0 0.0
  %92 = vmatprep.subr.mxu0 0.0
  %93 = vmatpush1.msra.mxu0 0.0
  %94 = vmatprep.subr.mxu0 0.0
  %95 = vmatpush1.msra.mxu0 0.0
  %96 = vmatprep.subr.mxu0 0.0
  %97 = vmatpush1.msra.mxu0 0.0
  %98 = vmatprep.subr.mxu0 0.0
  %99 = vmatpush1.msra.mxu0 0.0
  %100 = vmatprep.subr.mxu0 0.0
  %101 = vmatpush1.msra.mxu0 0.0
  %102 = vmatprep.subr.mxu0 0.0
  %103 = vmatpush1.msra.mxu0 0.0
  %104 = vmatprep.subr.mxu0 0.0
  %105 = vmatpush1.msra.mxu0 0.0
  %106 = vmatprep.subr.mxu0 0.0
  %107 = vmatpush1.msra.mxu0 0.0
  %108 = vmatprep.subr.mxu0 0.0
  %109 = vmatpush1.msra.mxu0 0.0
  %110 = vmatprep.subr.mxu0 0.0
  %111 = vmatpush1.msra.mxu0 0.0
  %112 = vmatprep.subr.mxu0 0.0
  %113 = vmatpush1.msra.mxu0 0.0
  %114 = vmatprep.mubr.f32.mxu0 0.0
  %115 = vmatmul.mubr.f32.gmra.mrb[0].mxu0 %v48
  %v116 = vpop.f32.mrb[0].mxu0
  %v117 = vadd.f32 %v44, %v116
  %v118 = vpop.f32.mrb[0].mxu0
  %119 = vdwg.mxu0
  %120 = vst [vmem:[%s9] sm:$0xff] %v117
  %v121 = vld [vmem:[%s3] sm:$0xff]
  %v122 = vld [vmem:[%s3 + $0x8] sm:$0xff]
  %v123 = vld [vmem:[%s3 + $0x10] sm:$0xff]
  %v124 = vld [vmem:[%s3 + $0x18] sm:$0xff]
  %v125 = vld [vmem:[%s3 + $0x20] sm:$0xff]
  %v126 = vld [vmem:[%s3 + $0x28] sm:$0xff]
  %v127 = vld [vmem:[%s3 + $0x30] sm:$0xff]
  %v128 = vld [vmem:[%s3 + $0x38] sm:$0xff]
  %v129 = vld [vmem:[%s0] sm:$0xff]
  %v130 = vld [vmem:[%s0 + $0x8] sm:$0xff]
  %v131 = vld [vmem:[%s0 + $0x10] sm:$0xff]
  %v132 = vld [vmem:[%s0 + $0x18] sm:$0xff]
  %v133 = vld [vmem:[%s4] sm:$0xff]
  %v134 = vld [vmem:[%s4 + $0x8] sm:$0xff]
  %v135 = vld [vmem:[%s4 + $0x10] sm:$0xff]
  %v136 = vld [vmem:[%s4 + $0x18] sm:$0xff]
  %v137 = vld [vmem:[%s4 + $0x20] sm:$0xff]
  %v138 = vld [vmem:[%s4 + $0x28] sm:$0xff]
  %v139 = vld [vmem:[%s4 + $0x30] sm:$0xff]
  %v140 = vld [vmem:[%s4 + $0x38] sm:$0xff]
  %142 = vset.pattern.permute.xlu0 0
  %143 = vperm.xlu0 %142, %v133
  %v144 = vpop.permute.xlu0 %143
  %147 = vset.pattern.permute.xlu0 0
  %148 = vperm.xlu0 %147, %v134
  %v149 = vpop.permute.xlu0 %148
  %152 = vset.pattern.permute.xlu0 0
  %153 = vperm.xlu0 %152, %v135
  %v154 = vpop.permute.xlu0 %153
  %157 = vset.pattern.permute.xlu0 0
  %158 = vperm.xlu0 %157, %v136
  %v159 = vpop.permute.xlu0 %158
  %162 = vset.pattern.permute.xlu0 0
  %163 = vperm.xlu0 %162, %v137
  %v164 = vpop.permute.xlu0 %163
  %167 = vset.pattern.permute.xlu0 0
  %168 = vperm.xlu0 %167, %v138
  %v169 = vpop.permute.xlu0 %168
  %172 = vset.pattern.permute.xlu0 0
  %173 = vperm.xlu0 %172, %v139
  %v174 = vpop.permute.xlu0 %173
  %177 = vset.pattern.permute.xlu0 0
  %178 = vperm.xlu0 %177, %v140
  %v179 = vpop.permute.xlu0 %178
  %v182 = vsel %vm46, %v121, 0
  %v185 = vsel %vm46, %v122, 0
  %v188 = vsel %vm46, %v123, 0
  %v191 = vsel %vm46, %v124, 0
  %v194 = vsel %vm46, %v125, 0
  %v197 = vsel %vm46, %v126, 0
  %v200 = vsel %vm46, %v127, 0
  %v203 = vsel %vm46, %v128, 0
  %205 = vmatprep.subr.mxu0 0.0
  %206 = vmatpush1.msra.mxu0 %v129
  %207 = vmatprep.subr.mxu0 0.0
  %208 = vmatpush1.msra.mxu0 %v130
  %209 = vmatprep.subr.mxu0 0.0
  %210 = vmatpush1.msra.mxu0 %v131
  %211 = vmatprep.subr.mxu0 0.0
  %212 = vmatpush1.msra.mxu0 %v132
  %213 = vmatprep.subr.mxu0 0.0
  %214 = vmatpush1.msra.mxu0 0.0
  %215 = vmatprep.subr.mxu0 0.0
  %216 = vmatpush1.msra.mxu0 0.0
  %217 = vmatprep.subr.mxu0 0.0
  %218 = vmatpush1.msra.mxu0 0.0
  %219 = vmatprep.subr.mxu0 0.0
  %220 = vmatpush1.msra.mxu0 0.0
  %221 = vmatprep.subr.mxu0 0.0
  %222 = vmatpush1.msra.mxu0 0.0
  %223 = vmatprep.subr.mxu0 0.0
  %224 = vmatpush1.msra.mxu0 0.0
  %225 = vmatprep.subr.mxu0 0.0
  %226 = vmatpush1.msra.mxu0 0.0
  %227 = vmatprep.subr.mxu0 0.0
  %228 = vmatpush1.msra.mxu0 0.0
  %229 = vmatprep.subr.mxu0 0.0
  %230 = vmatpush1.msra.mxu0 0.0
  %231 = vmatprep.subr.mxu0 0.0
  %232 = vmatpush1.msra.mxu0 0.0
  %233 = vmatprep.subr.mxu0 0.0
  %234 = vmatpush1.msra.mxu0 0.0
  %235 = vmatprep.subr.mxu0 0.0
  %236 = vmatpush1.msra.mxu0 0.0
  %237 = vmatprep.subr.mxu0 0.0
  %238 = vmatpush1.msra.mxu0 0.0
  %239 = vmatprep.subr.mxu0 0.0
  %240 = vmatpush1.msra.mxu0 0.0
  %241 = vmatprep.subr.mxu0 0.0
  %242 = vmatpush1.msra.mxu0 0.0
  %243 = vmatprep.subr.mxu0 0.0
  %244 = vmatpush1.msra.mxu0 0.0
  %245 = vmatprep.subr.mxu0 0.0
  %246 = vmatpush1.msra.mxu0 0.0
  %247 = vmatprep.subr.mxu0 0.0
  %248 = vmatpush1.msra.mxu0 0.0
  %249 = vmatprep.subr.mxu0 0.0
  %250 = vmatpush1.msra.mxu0 0.0
  %251 = vmatprep.subr.mxu0 0.0
  %252 = vmatpush1.msra.mxu0 0.0
  %253 = vmatprep.subr.mxu0 0.0
  %254 = vmatpush1.msra.mxu0 0.0
  %255 = vmatprep.subr.mxu0 0.0
  %256 = vmatpush1.msra.mxu0 0.0
  %257 = vmatprep.subr.mxu0 0.0
  %258 = vmatpush1.msra.mxu0 0.0
  %259 = vmatprep.subr.mxu0 0.0
  %260 = vmatpush1.msra.mxu0 0.0
  %261 = vmatprep.subr.mxu0 0.0
  %262 = vmatpush1.msra.mxu0 0.0
  %263 = vmatprep.subr.mxu0 0.0
  %264 = vmatpush1.msra.mxu0 0.0
  %265 = vmatprep.subr.mxu0 0.0
  %266 = vmatpush1.msra.mxu0 0.0
  %267 = vmatprep.subr.mxu0 0.0
  %268 = vmatpush1.msra.mxu0 0.0
  %269 = vmatprep.mubr.f32.mxu0 0.0
  %270 = vmatmul.mubr.f32.gmra.mrb[0].mxu0 %v182
  %v271 = vpop.f32.mrb[0].mxu0
  %v272 = vadd.f32 %v144, %v271
  %v273 = vpop.f32.mrb[0].mxu0
  %274 = vmatprep.mubr.f32.mxu0 0.0
  %275 = vmatmul.mubr.f32.gmra.mrb[0].mxu0 %v185
  %v276 = vpop.f32.mrb[0].mxu0
  %v277 = vadd.f32 %v149, %v276
  %v278 = vpop.f32.mrb[0].mxu0
  %279 = vmatprep.mubr.f32.mxu0 0.0
  %280 = vmatmul.mubr.f32.gmra.mrb[0].mxu0 %v188
  %v281 = vpop.f32.mrb[0].mxu0
  %v282 = vadd.f32 %v154, %v281
  %v283 = vpop.f32.mrb[0].mxu0
  %284 = vmatprep.mubr.f32.mxu0 0.0
  %285 = vmatmul.mubr.f32.gmra.mrb[0].mxu0 %v191
  %v286 = vpop.f32.mrb[0].mxu0
  %v287 = vadd.f32 %v159, %v286
  %v288 = vpop.f32.mrb[0].mxu0
  %289 = vmatprep.mubr.f32.mxu0 0.0
  %290 = vmatmul.mubr.f32.gmra.mrb[0].mxu0 %v194
  %v291 = vpop.f32.mrb[0].mxu0
  %v292 = vadd.f32 %v164, %v291
  %v293 = vpop.f32.mrb[0].mxu0
  %294 = vmatprep.mubr.f32.mxu0 0.0
  %295 = vmatmul.mubr.f32.gmra.mrb[0].mxu0 %v197
  %v296 = vpop.f32.mrb[0].mxu0
  %v297 = vadd.f32 %v169, %v296
  %v298 = vpop.f32.mrb[0].mxu0
  %299 = vmatprep.mubr.f32.mxu0 0.0
  %300 = vmatmul.mubr.f32.gmra.mrb[0].mxu0 %v200
  %v301 = vpop.f32.mrb[0].mxu0
  %v302 = vadd.f32 %v174, %v301
  %v303 = vpop.f32.mrb[0].mxu0
  %304 = vmatprep.mubr.f32.mxu0 0.0
  %305 = vmatmul.mubr.f32.gmra.mrb[0].mxu0 %v203
  %v306 = vpop.f32.mrb[0].mxu0
  %v307 = vadd.f32 %v179, %v306
  %v308 = vpop.f32.mrb[0].mxu0
  %309 = vdwg.mxu0
  %v310 = vld [vmem:[%s6] sm:$0xff]
  %v311 = vld [vmem:[%s7] sm:$0xff]
  %v312 = vld [vmem:[%s5] sm:$0xff]
  %314 = vset.pattern.permute.xlu0 0
  %315 = vperm.xlu0 %314, %v312
  %v316 = vpop.permute.xlu0 %315
  %v318 = vsub.f32 %v272, %v316
  %v319 = vld [vmem:[%s5 + $0x8] sm:$0xff]
  %321 = vset.pattern.permute.xlu0 0
  %322 = vperm.xlu0 %321, %v319
  %v323 = vpop.permute.xlu0 %322
  %v325 = vsub.f32 %v277, %v323
  %v326 = vld [vmem:[%s5 + $0x10] sm:$0xff]
  %328 = vset.pattern.permute.xlu0 0
  %329 = vperm.xlu0 %328, %v326
  %v330 = vpop.permute.xlu0 %329
  %v332 = vsub.f32 %v282, %v330
  %v333 = vld [vmem:[%s5 + $0x18] sm:$0xff]
  %335 = vset.pattern.permute.xlu0 0
  %336 = vperm.xlu0 %335, %v333
  %v337 = vpop.permute.xlu0 %336
  %v339 = vsub.f32 %v287, %v337
  %v340 = vld [vmem:[%s5 + $0x20] sm:$0xff]
  %342 = vset.pattern.permute.xlu0 0
  %343 = vperm.xlu0 %342, %v340
  %v344 = vpop.permute.xlu0 %343
  %v346 = vsub.f32 %v292, %v344
  %v347 = vld [vmem:[%s5 + $0x28] sm:$0xff]
  %349 = vset.pattern.permute.xlu0 0
  %350 = vperm.xlu0 %349, %v347
  %v351 = vpop.permute.xlu0 %350
  %v353 = vsub.f32 %v297, %v351
  %v354 = vld [vmem:[%s5 + $0x30] sm:$0xff]
  %356 = vset.pattern.permute.xlu0 0
  %357 = vperm.xlu0 %356, %v354
  %v358 = vpop.permute.xlu0 %357
  %v360 = vsub.f32 %v302, %v358
  %v361 = vld [vmem:[%s5 + $0x38] sm:$0xff]
  %363 = vset.pattern.permute.xlu0 0
  %364 = vperm.xlu0 %363, %v361
  %v365 = vpop.permute.xlu0 %364
  %v367 = vsub.f32 %v307, %v365
  %v368 = vmul.f32 %v318, %v318
  %v369 = vmul.f32 %v325, %v325
  %v370 = vadd.f32 %v368, %v369
  %v371 = vmul.f32 %v332, %v332
  %v372 = vadd.f32 %v370, %v371
  %v373 = vmul.f32 %v339, %v339
  %v374 = vadd.f32 %v372, %v373
  %v375 = vmul.f32 %v346, %v346
  %v376 = vadd.f32 %v374, %v375
  %v377 = vmul.f32 %v353, %v353
  %v378 = vadd.f32 %v376, %v377
  %v379 = vmul.f32 %v360, %v360
  %v380 = vadd.f32 %v378, %v379
  %v381 = vmul.f32 %v367, %v367
  %v382 = vadd.f32 %v380, %v381
  %v383 = vrsqrt.pop %v382
  %v384 = vmul.f32 %v382, %v383
  %vm385 = vcmp.eq.f32.partialorder %v382, inf
  %v386 = vsel %vm385, %v382, %v384
  %vm387 = vcmp.eq.f32.partialorder %v382, 0.0
  %v388 = vand.u32 %v382, 2147483648
  %v389 = vsel %vm387, %v388, %v386
  %391 = vset.pattern.permute.xlu0 0
  %392 = vperm.xlu0 %391, %v310
  %v393 = vpop.permute.xlu0 %392
  %v395 = vadd.f32 %v393, %v389
  %v396 = vrcp.pop %v395
  %398 = vset.pattern.permute.xlu0 0
  %399 = vperm.xlu0 %398, %v311
  %v400 = vpop.permute.xlu0 %399
  %v402 = vmul.f32 %v400, %v396
  %v403 = vmul.f32 %v402, %v318
  %v404 = vadd.f32 %v272, %v403
  %v405 = vmul.f32 %v402, %v325
  %v406 = vadd.f32 %v277, %v405
  %v407 = vmul.f32 %v402, %v332
  %v408 = vadd.f32 %v282, %v407
  %v409 = vmul.f32 %v402, %v339
  %v410 = vadd.f32 %v287, %v409
  %v411 = vmul.f32 %v402, %v346
  %v412 = vadd.f32 %v292, %v411
  %v413 = vmul.f32 %v402, %v353
  %v414 = vadd.f32 %v297, %v413
  %v415 = vmul.f32 %v402, %v360
  %v416 = vadd.f32 %v302, %v415
  %v417 = vmul.f32 %v402, %v367
  %v418 = vadd.f32 %v307, %v417
  %v419 = vadd.f32 %v402, 1.0
  %v420 = vmul.f32 %v419, %v419
  %v421 = vmul.f32 %v419, %v420
  %v422 = vmul.f32 %v420, %v420
  %v423 = vmul.f32 %v421, %v422
  %v424 = vmul.f32 %v393, %v396
  %v425 = vmul.f32 %v402, %v424
  %v426 = vadd.f32 %v425, 1.0
  %v427 = vmul.f32 %v423, %v426
  %v428 = vlog2.pop %v427
  %v429 = vmul.f32 %v428, 0.6931472
  %430 = vset.pattern.permute.xlu0 1
  %431 = vperm.xlu0 %430, %v312
  %v432 = vpop.permute.xlu0 %431
  %v434 = vsub.f32 %v404, %v432
  %435 = vset.pattern.permute.xlu0 1
  %436 = vperm.xlu0 %435, %v319
  %v437 = vpop.permute.xlu0 %436
  %v439 = vsub.f32 %v406, %v437
  %440 = vset.pattern.permute.xlu0 1
  %441 = vperm.xlu0 %440, %v326
  %v442 = vpop.permute.xlu0 %441
  %v444 = vsub.f32 %v408, %v442
  %445 = vset.pattern.permute.xlu0 1
  %446 = vperm.xlu0 %445, %v333
  %v447 = vpop.permute.xlu0 %446
  %v449 = vsub.f32 %v410, %v447
  %450 = vset.pattern.permute.xlu0 1
  %451 = vperm.xlu0 %450, %v340
  %v452 = vpop.permute.xlu0 %451
  %v454 = vsub.f32 %v412, %v452
  %455 = vset.pattern.permute.xlu0 1
  %456 = vperm.xlu0 %455, %v347
  %v457 = vpop.permute.xlu0 %456
  %v459 = vsub.f32 %v414, %v457
  %460 = vset.pattern.permute.xlu0 1
  %461 = vperm.xlu0 %460, %v354
  %v462 = vpop.permute.xlu0 %461
  %v464 = vsub.f32 %v416, %v462
  %465 = vset.pattern.permute.xlu0 1
  %466 = vperm.xlu0 %465, %v361
  %v467 = vpop.permute.xlu0 %466
  %v469 = vsub.f32 %v418, %v467
  %v470 = vmul.f32 %v434, %v434
  %v471 = vmul.f32 %v439, %v439
  %v472 = vadd.f32 %v470, %v471
  %v473 = vmul.f32 %v444, %v444
  %v474 = vadd.f32 %v472, %v473
  %v475 = vmul.f32 %v449, %v449
  %v476 = vadd.f32 %v474, %v475
  %v477 = vmul.f32 %v454, %v454
  %v478 = vadd.f32 %v476, %v477
  %v479 = vmul.f32 %v459, %v459
  %v480 = vadd.f32 %v478, %v479
  %v481 = vmul.f32 %v464, %v464
  %v482 = vadd.f32 %v480, %v481
  %v483 = vmul.f32 %v469, %v469
  %v484 = vadd.f32 %v482, %v483
  %v485 = vrsqrt.pop %v484
  %v486 = vmul.f32 %v484, %v485
  %vm487 = vcmp.eq.f32.partialorder %v484, inf
  %v488 = vsel %vm487, %v484, %v486
  %vm489 = vcmp.eq.f32.partialorder %v484, 0.0
  %v490 = vand.u32 %v484, 2147483648
  %v491 = vsel %vm489, %v490, %v488
  %492 = vset.pattern.permute.xlu0 1
  %493 = vperm.xlu0 %492, %v310
  %v494 = vpop.permute.xlu0 %493
  %v496 = vadd.f32 %v494, %v491
  %v497 = vrcp.pop %v496
  %498 = vset.pattern.permute.xlu0 1
  %499 = vperm.xlu0 %498, %v311
  %v500 = vpop.permute.xlu0 %499
  %v502 = vmul.f32 %v500, %v497
  %v503 = vmul.f32 %v502, %v434
  %v504 = vadd.f32 %v404, %v503
  %v505 = vmul.f32 %v502, %v439
  %v506 = vadd.f32 %v406, %v505
  %v507 = vmul.f32 %v502, %v444
  %v508 = vadd.f32 %v408, %v507
  %v509 = vmul.f32 %v502, %v449
  %v510 = vadd.f32 %v410, %v509
  %v511 = vmul.f32 %v502, %v454
  %v512 = vadd.f32 %v412, %v511
  %v513 = vmul.f32 %v502, %v459
  %v514 = vadd.f32 %v414, %v513
  %v515 = vmul.f32 %v502, %v464
  %v516 = vadd.f32 %v416, %v515
  %v517 = vmul.f32 %v502, %v469
  %v518 = vadd.f32 %v418, %v517
  %v519 = vadd.f32 %v502, 1.0
  %v520 = vmul.f32 %v519, %v519
  %v521 = vmul.f32 %v519, %v520
  %v522 = vmul.f32 %v520, %v520
  %v523 = vmul.f32 %v521, %v522
  %v524 = vmul.f32 %v494, %v497
  %v525 = vmul.f32 %v502, %v524
  %v526 = vadd.f32 %v525, 1.0
  %v527 = vmul.f32 %v523, %v526
  %v528 = vlog2.pop %v527
  %v529 = vmul.f32 %v528, 0.6931472
  %v530 = vadd.f32 %v429, %v529
  %531 = vset.pattern.permute.xlu0 2
  %532 = vperm.xlu0 %531, %v312
  %v533 = vpop.permute.xlu0 %532
  %v535 = vsub.f32 %v504, %v533
  %536 = vset.pattern.permute.xlu0 2
  %537 = vperm.xlu0 %536, %v319
  %v538 = vpop.permute.xlu0 %537
  %v540 = vsub.f32 %v506, %v538
  %541 = vset.pattern.permute.xlu0 2
  %542 = vperm.xlu0 %541, %v326
  %v543 = vpop.permute.xlu0 %542
  %v545 = vsub.f32 %v508, %v543
  %546 = vset.pattern.permute.xlu0 2
  %547 = vperm.xlu0 %546, %v333
  %v548 = vpop.permute.xlu0 %547
  %v550 = vsub.f32 %v510, %v548
  %551 = vset.pattern.permute.xlu0 2
  %552 = vperm.xlu0 %551, %v340
  %v553 = vpop.permute.xlu0 %552
  %v555 = vsub.f32 %v512, %v553
  %556 = vset.pattern.permute.xlu0 2
  %557 = vperm.xlu0 %556, %v347
  %v558 = vpop.permute.xlu0 %557
  %v560 = vsub.f32 %v514, %v558
  %561 = vset.pattern.permute.xlu0 2
  %562 = vperm.xlu0 %561, %v354
  %v563 = vpop.permute.xlu0 %562
  %v565 = vsub.f32 %v516, %v563
  %566 = vset.pattern.permute.xlu0 2
  %567 = vperm.xlu0 %566, %v361
  %v568 = vpop.permute.xlu0 %567
  %v570 = vsub.f32 %v518, %v568
  %v571 = vmul.f32 %v535, %v535
  %v572 = vmul.f32 %v540, %v540
  %v573 = vadd.f32 %v571, %v572
  %v574 = vmul.f32 %v545, %v545
  %v575 = vadd.f32 %v573, %v574
  %v576 = vmul.f32 %v550, %v550
  %v577 = vadd.f32 %v575, %v576
  %v578 = vmul.f32 %v555, %v555
  %v579 = vadd.f32 %v577, %v578
  %v580 = vmul.f32 %v560, %v560
  %v581 = vadd.f32 %v579, %v580
  %v582 = vmul.f32 %v565, %v565
  %v583 = vadd.f32 %v581, %v582
  %v584 = vmul.f32 %v570, %v570
  %v585 = vadd.f32 %v583, %v584
  %v586 = vrsqrt.pop %v585
  %v587 = vmul.f32 %v585, %v586
  %vm588 = vcmp.eq.f32.partialorder %v585, inf
  %v589 = vsel %vm588, %v585, %v587
  %vm590 = vcmp.eq.f32.partialorder %v585, 0.0
  %v591 = vand.u32 %v585, 2147483648
  %v592 = vsel %vm590, %v591, %v589
  %593 = vset.pattern.permute.xlu0 2
  %594 = vperm.xlu0 %593, %v310
  %v595 = vpop.permute.xlu0 %594
  %v597 = vadd.f32 %v595, %v592
  %v598 = vrcp.pop %v597
  %599 = vset.pattern.permute.xlu0 2
  %600 = vperm.xlu0 %599, %v311
  %v601 = vpop.permute.xlu0 %600
  %v603 = vmul.f32 %v601, %v598
  %v604 = vmul.f32 %v603, %v535
  %v605 = vadd.f32 %v504, %v604
  %v606 = vmul.f32 %v603, %v540
  %v607 = vadd.f32 %v506, %v606
  %v608 = vmul.f32 %v603, %v545
  %v609 = vadd.f32 %v508, %v608
  %v610 = vmul.f32 %v603, %v550
  %v611 = vadd.f32 %v510, %v610
  %v612 = vmul.f32 %v603, %v555
  %v613 = vadd.f32 %v512, %v612
  %v614 = vmul.f32 %v603, %v560
  %v615 = vadd.f32 %v514, %v614
  %v616 = vmul.f32 %v603, %v565
  %v617 = vadd.f32 %v516, %v616
  %v618 = vmul.f32 %v603, %v570
  %v619 = vadd.f32 %v518, %v618
  %v620 = vadd.f32 %v603, 1.0
  %v621 = vmul.f32 %v620, %v620
  %v622 = vmul.f32 %v620, %v621
  %v623 = vmul.f32 %v621, %v621
  %v624 = vmul.f32 %v622, %v623
  %v625 = vmul.f32 %v595, %v598
  %v626 = vmul.f32 %v603, %v625
  %v627 = vadd.f32 %v626, 1.0
  %v628 = vmul.f32 %v624, %v627
  %v629 = vlog2.pop %v628
  %v630 = vmul.f32 %v629, 0.6931472
  %v631 = vadd.f32 %v530, %v630
  %v632 = vmul.f32 %v605, %v605
  %v633 = vmul.f32 %v607, %v607
  %v634 = vadd.f32 %v632, %v633
  %v635 = vmul.f32 %v609, %v609
  %v636 = vadd.f32 %v634, %v635
  %v637 = vmul.f32 %v611, %v611
  %v638 = vadd.f32 %v636, %v637
  %v639 = vmul.f32 %v613, %v613
  %v640 = vadd.f32 %v638, %v639
  %v641 = vmul.f32 %v615, %v615
  %v642 = vadd.f32 %v640, %v641
  %v643 = vmul.f32 %v617, %v617
  %v644 = vadd.f32 %v642, %v643
  %v645 = vmul.f32 %v619, %v619
  %v646 = vadd.f32 %v644, %v645
  %v647 = vmul.f32 %v646, 0.5
  %v648 = vsub.f32 -7.351508, %v647
  %v649 = vadd.f32 %v648, %v631
  %v650 = vld [vmem:[%s8] sm:$0xff]
  %652 = vset.pattern.permute.xlu0 0
  %653 = vperm.xlu0 %652, %v650
  %v654 = vpop.permute.xlu0 %653
  %v656 = vadd.f32 %v649, %v654
  %v657 = vadd.f32 %v656, 10.124097
  %v658 = vmax.f32 %v657, -30.0
  %v659 = vmin.f32 %v658, 30.0
  %v660 = vmul.f32 %v659, 1.442695
  %v661 = vpow.pop %v660
  %662 = vst [vmem:[%s10] sm:$0xff] %v661
  %v663 = vadd.f32 %v661, 1.0
  %664 = vst [vmem:[%s11] sm:$0xff] %v663
  // Predicated region
  $region38: #{token_level_alpha_forward.1} parent=0 // pred_check
    _
  $region39: #{token_level_alpha_forward.1} parent=0 // pred_check_branch
    %666 = sbr.rel (0) target = $region41
  $region40: #{token_level_alpha_forward.1} parent=0 // pred_region
    _
  $region41: #{token_level_alpha_forward.1} parent=0 // pred_fallthru
    _
  // Predicated region
  $region42: #{token_level_alpha_forward.1} parent=0 // pred_check
    _
  $region43: #{token_level_alpha_forward.1} parent=0 // pred_check_branch
    %668 = sbr.rel (0) target = $region45
  $region44: #{token_level_alpha_forward.1} parent=0 // pred_region
    _
  $region45: #{token_level_alpha_forward.1} parent=0 // pred_fallthru
    _
  // Predicated region
  $region46: #{token_level_alpha_forward.1} parent=0 // pred_check
    _
  $region47: #{token_level_alpha_forward.1} parent=0 // pred_check_branch
    %670 = sbr.rel (0) target = $region49
  $region48: #{token_level_alpha_forward.1} parent=0 // pred_region
    _
  $region49: #{token_level_alpha_forward.1} parent=0 // pred_fallthru
    _
  // Predicated region
  $region50: #{token_level_alpha_forward.1} parent=0 // pred_check
    _
  $region51: #{token_level_alpha_forward.1} parent=0 // pred_check_branch
    %672 = sbr.rel (0) target = $region53
  $region52: #{token_level_alpha_forward.1} parent=0 // pred_region
    _
  $region53: #{token_level_alpha_forward.1} parent=0 // pred_fallthru
    _
  // Predicated region
  $region54: #{token_level_alpha_forward.1} parent=0 // pred_check
    _
  $region55: #{token_level_alpha_forward.1} parent=0 // pred_check_branch
    %674 = sbr.rel (0) target = $region57
  $region56: #{token_level_alpha_forward.1} parent=0 // pred_region
    _
  $region57: #{token_level_alpha_forward.1} parent=0 // pred_fallthru
    _
  // Predicated region
  $region58: #{token_level_alpha_forward.1} parent=0 // pred_check
    _
  $region59: #{token_level_alpha_forward.1} parent=0 // pred_check_branch
    %676 = sbr.rel (0) target = $region61
  $region60: #{token_level_alpha_forward.1} parent=0 // pred_region
    _
  $region61: #{token_level_alpha_forward.1} parent=0 // pred_fallthru
    _

</llo_original>
